<compile_context>
chip_gen: v5e
topology: v5e:2x2
jax: 0.10.0
libtpu: 0.0.40
codegen_flags: <defaults>
</compile_context>

<pallas_src>
import numpy as np
import jax
import jax.numpy as jnp
from jax.experimental import pallas as pl
from jax.experimental.pallas import tpu as pltpu

# -------- hyper-params (stand-ins for `params`) --------
R = 16          # params.R   -> encoded dim = 4*R = 64
M = 10          # params.M
SIGMA = 10.0    # params.sigma
H1, H2 = 128, 64
NP = 128        # lane-padded classifier width (output sliced to M outside)


def locaid_kernel(x_ref, p_ref, phase_ref,
                  w1_ref, b1_ref, w2_ref, b2_ref, w3_ref, b3_ref,
                  out_ref):
    x = x_ref[...]                                                     # (TB, 2) f32

    # Positional RFF on the VPU: vp[b,f] = x[b,0]*P0[f] + x[b,1]*P1[f]
    vp = x[:, 0:1] * p_ref[0:1, :] + x[:, 1:2] * p_ref[1:2, :]         # (TB, 4R)
    # cos(t) = sin(t + pi/2): single EUP transcendental per lane, no select
    enc = jnp.sin(vp + phase_ref[...])                                 # (TB, 4R) f32

    # Ziplayer (Dropout(0.1) is identity in eval mode); bf16 MXU, f32 accumulate
    h1 = jnp.maximum(
        jnp.dot(enc.astype(jnp.bfloat16), w1_ref[...],
                preferred_element_type=jnp.float32) + b1_ref[...], 0.0)  # (TB, 128)
    h2 = jnp.maximum(
        jnp.dot(h1.astype(jnp.bfloat16), w2_ref[...],
                preferred_element_type=jnp.float32) + b2_ref[...], 0.0)  # (TB, 64)

    # Classifier (lane-padded to NP=128; zero columns beyond M)
    out = jnp.dot(h2.astype(jnp.bfloat16), w3_ref[...],
                  preferred_element_type=jnp.float32) + b3_ref[...]      # (TB, 128)
    out_ref[...] = out.astype(out_ref.dtype)


def build_rff_constants():
    """P: (2, 4R) per-coordinate frequency rows; phase: (1, 4R), pi/2 on cos lanes."""
    j = np.arange(R, dtype=np.float64)
    coeffs = (2.0 * np.pi * (SIGMA ** (j / R))).astype(np.float32)
    P = np.zeros((2, 4 * R), np.float32)
    phase = np.zeros((1, 4 * R), np.float32)
    # flatten order of rff PositionalEncoding: [coord0: cos R, sin R | coord1: cos R, sin R]
    for c in range(2):
        P[c, c * 2 * R:          c * 2 * R + R]     = coeffs   # cos slots
        P[c, c * 2 * R + R:      c * 2 * R + 2 * R] = coeffs   # sin slots
        phase[0, c * 2 * R: c * 2 * R + R] = np.pi / 2.0       # cos(t) = sin(t + pi/2)
    return jnp.asarray(P), jnp.asarray(phase)


def init_params(key):
    """Deterministic synthetic weights (PyTorch Linear fan-in init, stored as (in, out))."""
    ks = jax.random.split(key, 6)

    def linear(kw, kb, fan_in, fan_out):
        bound = 1.0 / np.sqrt(fan_in)
        w = jax.random.uniform(kw, (fan_in, fan_out), jnp.float32, -bound, bound)
        b = jax.random.uniform(kb, (1, fan_out), jnp.float32, -bound, bound)
        return w, b

    w1, b1 = linear(ks[0], ks[1], 4 * R, H1)
    w2, b2 = linear(ks[2], ks[3], H1, H2)
    w3, b3 = linear(ks[4], ks[5], H2, M)
    return w1, b1, w2, b2, w3, b3


def locaid_forward(x, params, *, tb=None):
    w1, b1, w2, b2, w3, b3 = params
    P, phase = build_rff_constants()
    B = x.shape[0]

    # batch tile: multiple of 8 sublanes, capped at 512 rows
    if tb is None:
        tb = min(512, max(8, ((B + 7) // 8) * 8))
    n_blocks = pl.cdiv(B, tb)
    b_pad = n_blocks * tb
    if b_pad != B:
        x = jnp.pad(x, ((0, b_pad - B), (0, 0)))

    # bf16 weights for the MXU; biases stay f32 (f32 accumulation in kernel)
    w1b = w1.astype(jnp.bfloat16)
    w2b = w2.astype(jnp.bfloat16)
    # lane-dense classifier: zero-pad N from M to NP=128
    w3p = jnp.zeros((H2, NP), jnp.float32).at[:, :M].set(w3).astype(jnp.bfloat16)
    b3p = jnp.zeros((1, NP), jnp.float32).at[:, :M].set(b3)

    def const(shape):
        return pl.BlockSpec(shape, lambda i: (0, 0))

    flops = 2 * b_pad * (4 * R * H1 + H1 * H2 + H2 * NP)
    cost = pl.CostEstimate(
        flops=flops,
        transcendentals=b_pad * 4 * R,
        bytes_accessed=(b_pad * 2 * 4 + b_pad * NP * 4
                        + (4 * R * H1 + H1 * H2 + H2 * NP) * 2
                        + (H1 + H2 + NP) * 4),
    )

    out = pl.pallas_call(
        locaid_kernel,
        out_shape=jax.ShapeDtypeStruct((b_pad, NP), jnp.float32),
        grid=(n_blocks,),
        in_specs=[
            pl.BlockSpec((tb, 2), lambda i: (i, 0)),   # x tile (pipelined over batch)
            const((2, 4 * R)),                         # P      (VMEM-resident)
            const((1, 4 * R)),                         # phase
            const((4 * R, H1)),                        # w1
            const((1, H1)),                            # b1
            const((H1, H2)),                           # w2
            const((1, H2)),                            # b2
            const((H2, NP)),                           # w3 (lane-padded)
            const((1, NP)),                            # b3 (lane-padded)
        ],
        out_specs=pl.BlockSpec((tb, NP), lambda i: (i, 0)),
        compiler_params=pltpu.CompilerParams(
            dimension_semantics=("parallel",),          # megacore sharding on v7x
            vmem_limit_bytes=32 * 1024 * 1024,
        ),
        cost_estimate=cost,
    )(x, P, phase, w1b, b1, w2b, b2, w3p, b3p)

    return out[:B, :M]


def locaid_reference(x, params):
    """Pure-JAX f32 reference for a sanity check (eval mode: Dropout = identity)."""
    w1, b1, w2, b2, w3, b3 = params
    j = jnp.arange(R, dtype=jnp.float32)
    coeffs = 2.0 * jnp.pi * (SIGMA ** (j / R))
    vp = x[:, :, None] * coeffs[None, None, :]                   # (B, 2, R)
    enc = jnp.concatenate([jnp.cos(vp), jnp.sin(vp)], axis=-1)   # (B, 2, 2R)
    enc = enc.reshape(x.shape[0], 4 * R)                         # (B, 4R)
    h1 = jnp.maximum(enc @ w1 + b1, 0.0)
    h2 = jnp.maximum(h1 @ w2 + b2, 0.0)
    return h2 @ w3 + b3


if __name__ == "__main__":
    key = jax.random.PRNGKey(0)
    k_x, k_p, k_x2 = jax.random.split(key, 3)

    params = init_params(k_p)

    # small batch of (x, y) coordinates
    B = 8
    x = jax.random.uniform(k_x, (B, 2), jnp.float32)
    out = jax.block_until_ready(locaid_forward(x, params))
    ref = locaid_reference(x, params)
    # bf16 MXU inputs with f32 accumulation -> tolerance loosened accordingly
    np.testing.assert_allclose(np.asarray(out), np.asarray(ref), rtol=2e-2, atol=2e-2)

    # second check: exercises batch padding + multi-block grid
    B2 = 200
    x2 = jax.random.uniform(k_x2, (B2, 2), jnp.float32)
    out2 = jax.block_until_ready(locaid_forward(x2, params, tb=64))
    ref2 = locaid_reference(x2, params)
    np.testing.assert_allclose(np.asarray(out2), np.asarray(ref2), rtol=2e-2, atol=2e-2)

    print("KERNEL_OK")
</pallas_src>

<mosaic_0001>
module attributes {stable_mosaic.version = 11 : i64} {
  func.func @locaid_kernel(%arg0: i32, %arg1: memref<8x2xf32, #tpu.memory_space<vmem>>, %arg2: memref<2x64xf32, #tpu.memory_space<vmem>>, %arg3: memref<1x64xf32, #tpu.memory_space<vmem>>, %arg4: memref<64x128xbf16, #tpu.memory_space<vmem>>, %arg5: memref<1x128xf32, #tpu.memory_space<vmem>>, %arg6: memref<128x64xbf16, #tpu.memory_space<vmem>>, %arg7: memref<1x64xf32, #tpu.memory_space<vmem>>, %arg8: memref<64x128xbf16, #tpu.memory_space<vmem>>, %arg9: memref<1x128xf32, #tpu.memory_space<vmem>>, %arg10: memref<8x128xf32, #tpu.memory_space<vmem>>) attributes {dimension_semantics = [#tpu.dimension_semantics<parallel>], iteration_bounds = array<i64: 1>, scalar_prefetch = 0 : i64, scratch_operands = 0 : i64, tpu.core_type = #tpu.core_type<tc>, window_params = [{transform_indices = @transform_0, window_bounds = array<i64: 8, 2>}, {pipeline_mode = #tpu.pipeline_mode<synchronous>, transform_indices = @transform_1, window_bounds = array<i64: 2, 64>}, {pipeline_mode = #tpu.pipeline_mode<synchronous>, transform_indices = @transform_2, window_bounds = array<i64: 1, 64>}, {pipeline_mode = #tpu.pipeline_mode<synchronous>, transform_indices = @transform_3, window_bounds = array<i64: 64, 128>}, {pipeline_mode = #tpu.pipeline_mode<synchronous>, transform_indices = @transform_4, window_bounds = array<i64: 1, 128>}, {pipeline_mode = #tpu.pipeline_mode<synchronous>, transform_indices = @transform_5, window_bounds = array<i64: 128, 64>}, {pipeline_mode = #tpu.pipeline_mode<synchronous>, transform_indices = @transform_6, window_bounds = array<i64: 1, 64>}, {pipeline_mode = #tpu.pipeline_mode<synchronous>, transform_indices = @transform_7, window_bounds = array<i64: 64, 128>}, {pipeline_mode = #tpu.pipeline_mode<synchronous>, transform_indices = @transform_8, window_bounds = array<i64: 1, 128>}, {transform_indices = @transform_9, window_bounds = array<i64: 8, 128>}]} {
    %c0 = arith.constant 0 : index
    %c0_0 = arith.constant 0 : index
    %0 = vector.load %arg1[%c0, %c0_0] : memref<8x2xf32, #tpu.memory_space<vmem>>, vector<8x2xf32>
    %1 = vector.extract_strided_slice %0 {offsets = [0, 0], sizes = [8, 1], strides = [1, 1]} : vector<8x2xf32> to vector<8x1xf32>
    %c0_1 = arith.constant 0 : index
    %c0_2 = arith.constant 0 : index
    %2 = vector.load %arg2[%c0_1, %c0_2] : memref<2x64xf32, #tpu.memory_space<vmem>>, vector<1x64xf32>
    %3 = vector.broadcast %1 : vector<8x1xf32> to vector<8x64xf32>
    %4 = vector.broadcast %2 : vector<1x64xf32> to vector<8x64xf32>
    %5 = arith.mulf %3, %4 : vector<8x64xf32>
    %6 = vector.extract_strided_slice %0 {offsets = [0, 1], sizes = [8, 1], strides = [1, 1]} : vector<8x2xf32> to vector<8x1xf32>
    %c1 = arith.constant 1 : index
    %c0_3 = arith.constant 0 : index
    %7 = vector.load %arg2[%c1, %c0_3] : memref<2x64xf32, #tpu.memory_space<vmem>>, vector<1x64xf32>
    %8 = vector.broadcast %6 : vector<8x1xf32> to vector<8x64xf32>
    %9 = vector.broadcast %7 : vector<1x64xf32> to vector<8x64xf32>
    %10 = arith.mulf %8, %9 : vector<8x64xf32>
    %11 = arith.addf %5, %10 : vector<8x64xf32>
    %c0_4 = arith.constant 0 : index
    %c0_5 = arith.constant 0 : index
    %12 = vector.load %arg3[%c0_4, %c0_5] : memref<1x64xf32, #tpu.memory_space<vmem>>, vector<1x64xf32>
    %13 = vector.broadcast %12 : vector<1x64xf32> to vector<8x64xf32>
    %14 = arith.addf %11, %13 : vector<8x64xf32>
    %15 = math.sin %14 : vector<8x64xf32>
    %16 = arith.truncf %15 : vector<8x64xf32> to vector<8x64xbf16>
    %c0_6 = arith.constant 0 : index
    %c0_7 = arith.constant 0 : index
    %17 = vector.load %arg4[%c0_6, %c0_7] : memref<64x128xbf16, #tpu.memory_space<vmem>>, vector<64x128xbf16>
    %cst = arith.constant dense<0.000000e+00> : vector<8x128xf32>
    %18 = tpu.matmul %16, %17, %cst {dimension_numbers = #tpu.dot_dimension_numbers<[1], [0], [0], [1], [0, 0, 1, 1], [], []>} : vector<8x64xbf16>, vector<64x128xbf16>, vector<8x128xf32> -> vector<8x128xf32>
    %c0_8 = arith.constant 0 : index
    %c0_9 = arith.constant 0 : index
    %19 = vector.load %arg5[%c0_8, %c0_9] : memref<1x128xf32, #tpu.memory_space<vmem>>, vector<1x128xf32>
    %20 = vector.broadcast %19 : vector<1x128xf32> to vector<8x128xf32>
    %21 = arith.addf %18, %20 : vector<8x128xf32>
    %cst_10 = arith.constant 0.000000e+00 : f32
    %22 = vector.broadcast %cst_10 : f32 to vector<8x128xf32>
    %23 = arith.maximumf %21, %22 : vector<8x128xf32>
    %24 = arith.truncf %23 : vector<8x128xf32> to vector<8x128xbf16>
    %c0_11 = arith.constant 0 : index
    %c0_12 = arith.constant 0 : index
    %25 = vector.load %arg6[%c0_11, %c0_12] : memref<128x64xbf16, #tpu.memory_space<vmem>>, vector<128x64xbf16>
    %cst_13 = arith.constant dense<0.000000e+00> : vector<8x64xf32>
    %26 = tpu.matmul %24, %25, %cst_13 {dimension_numbers = #tpu.dot_dimension_numbers<[1], [0], [0], [1], [0, 0, 1, 1], [], []>} : vector<8x128xbf16>, vector<128x64xbf16>, vector<8x64xf32> -> vector<8x64xf32>
    %c0_14 = arith.constant 0 : index
    %c0_15 = arith.constant 0 : index
    %27 = vector.load %arg7[%c0_14, %c0_15] : memref<1x64xf32, #tpu.memory_space<vmem>>, vector<1x64xf32>
    %28 = vector.broadcast %27 : vector<1x64xf32> to vector<8x64xf32>
    %29 = arith.addf %26, %28 : vector<8x64xf32>
    %cst_16 = arith.constant 0.000000e+00 : f32
    %30 = vector.broadcast %cst_16 : f32 to vector<8x64xf32>
    %31 = arith.maximumf %29, %30 : vector<8x64xf32>
    %32 = arith.truncf %31 : vector<8x64xf32> to vector<8x64xbf16>
    %c0_17 = arith.constant 0 : index
    %c0_18 = arith.constant 0 : index
    %33 = vector.load %arg8[%c0_17, %c0_18] : memref<64x128xbf16, #tpu.memory_space<vmem>>, vector<64x128xbf16>
    %cst_19 = arith.constant dense<0.000000e+00> : vector<8x128xf32>
    %34 = tpu.matmul %32, %33, %cst_19 {dimension_numbers = #tpu.dot_dimension_numbers<[1], [0], [0], [1], [0, 0, 1, 1], [], []>} : vector<8x64xbf16>, vector<64x128xbf16>, vector<8x128xf32> -> vector<8x128xf32>
    %c0_20 = arith.constant 0 : index
    %c0_21 = arith.constant 0 : index
    %35 = vector.load %arg9[%c0_20, %c0_21] : memref<1x128xf32, #tpu.memory_space<vmem>>, vector<1x128xf32>
    %36 = vector.broadcast %35 : vector<1x128xf32> to vector<8x128xf32>
    %37 = arith.addf %34, %36 : vector<8x128xf32>
    %c0_22 = arith.constant 0 : index
    %c0_23 = arith.constant 0 : index
    %38 = vector.load %arg10[%c0_22, %c0_23] : memref<8x128xf32, #tpu.memory_space<vmem>>, vector<8x128xf32>
    tpu.vector_store %arg10[%c0_22, %c0_23], %37 {strides = array<i32>} : memref<8x128xf32, #tpu.memory_space<vmem>>, vector<8x128xf32>,
    return
  }
  func.func @transform_0(%arg0: i32) -> (i32, i32) {
    %c0_i32 = arith.constant 0 : i32
    %c0_i32_0 = arith.constant 0 : i32
    return %arg0, %c0_i32 : i32, i32
  }
  func.func @transform_1(%arg0: i32) -> (i32, i32) {
    %c0_i32 = arith.constant 0 : i32
    %c0_i32_0 = arith.constant 0 : i32
    %c0_i32_1 = arith.constant 0 : i32
    return %c0_i32, %c0_i32_0 : i32, i32
  }
  func.func @transform_2(%arg0: i32) -> (i32, i32) {
    %c0_i32 = arith.constant 0 : i32
    %c0_i32_0 = arith.constant 0 : i32
    %c0_i32_1 = arith.constant 0 : i32
    return %c0_i32, %c0_i32_0 : i32, i32
  }
  func.func @transform_3(%arg0: i32) -> (i32, i32) {
    %c0_i32 = arith.constant 0 : i32
    %c0_i32_0 = arith.constant 0 : i32
    %c0_i32_1 = arith.constant 0 : i32
    return %c0_i32, %c0_i32_0 : i32, i32
  }
  func.func @transform_4(%arg0: i32) -> (i32, i32) {
    %c0_i32 = arith.constant 0 : i32
    %c0_i32_0 = arith.constant 0 : i32
    %c0_i32_1 = arith.constant 0 : i32
    return %c0_i32, %c0_i32_0 : i32, i32
  }
  func.func @transform_5(%arg0: i32) -> (i32, i32) {
    %c0_i32 = arith.constant 0 : i32
    %c0_i32_0 = arith.constant 0 : i32
    %c0_i32_1 = arith.constant 0 : i32
    return %c0_i32, %c0_i32_0 : i32, i32
  }
  func.func @transform_6(%arg0: i32) -> (i32, i32) {
    %c0_i32 = arith.constant 0 : i32
    %c0_i32_0 = arith.constant 0 : i32
    %c0_i32_1 = arith.constant 0 : i32
    return %c0_i32, %c0_i32_0 : i32, i32
  }
  func.func @transform_7(%arg0: i32) -> (i32, i32) {
    %c0_i32 = arith.constant 0 : i32
    %c0_i32_0 = arith.constant 0 : i32
    %c0_i32_1 = arith.constant 0 : i32
    return %c0_i32, %c0_i32_0 : i32, i32
  }
  func.func @transform_8(%arg0: i32) -> (i32, i32) {
    %c0_i32 = arith.constant 0 : i32
    %c0_i32_0 = arith.constant 0 : i32
    %c0_i32_1 = arith.constant 0 : i32
    return %c0_i32, %c0_i32_0 : i32, i32
  }
  func.func @transform_9(%arg0: i32) -> (i32, i32) {
    %c0_i32 = arith.constant 0 : i32
    %c0_i32_0 = arith.constant 0 : i32
    return %arg0, %c0_i32 : i32, i32
  }
}

</mosaic_0001>

<llo_original>
// kernel: tpu_custom_call.1
$region0: #{tpu_custom_call.1}
  #allocation0 [shape = 'u32[]', space=smem, size = 0x4, offset = 0x4, fixed_abs, tag = 'smem constant byte address 0x4 - core index']
  #allocation1 [shape = 'u32[72,128]{1,0:T(1,128)}', space=vmem, size = 0x9000, scoped, tag = 'internal scratch']
  %s0 = inlined_call_operand.vmem [shape: f32[8,2], index: 0, kind: input, shape index: {}]
  %s1 = inlined_call_operand.vmem [shape: f32[2,64], index: 1, kind: input, shape index: {}]
  %s2 = inlined_call_operand.vmem [shape: f32[1,64], index: 2, kind: input, shape index: {}]
  %s3 = inlined_call_operand.vmem [shape: bf16[64,128], index: 3, kind: input, shape index: {}]
  %s4 = inlined_call_operand.vmem [shape: f32[1,128], index: 4, kind: input, shape index: {}]
  %s5 = inlined_call_operand.vmem [shape: bf16[128,64], index: 5, kind: input, shape index: {}]
  %s6 = inlined_call_operand.vmem [shape: f32[1,64], index: 6, kind: input, shape index: {}]
  %s7 = inlined_call_operand.vmem [shape: bf16[64,128], index: 7, kind: input, shape index: {}]
  %s8 = inlined_call_operand.vmem [shape: f32[1,128], index: 8, kind: input, shape index: {}]
  %s9 = inlined_call_operand.hbm [shape: f32[8,128], index: 9, kind: output, shape index: {}]
  %s10 = sld [smem:[#allocation0]]
  $region46: #{tpu_custom_call.1} parent=0
    _
  %s12 = ssub.s32 1, %s10
  %s13 = scalar_select 0, %s12, %s10
  $region1: #{tpu_custom_call.1} parent=0
    #allocation2 [shape = 'u8[4096]{0}', space=vmem, size = 0x1000, scoped, tag = 'output window, operand 0, single buffered']
    #allocation3 [shape = 's32[1]{0}', space=sflag, size = 0x4, scoped, tag = 'scoped memory for tpu_custom_call.1']
    %14 = vsyncpa [#allocation3], 0
    // Predicated region
    $region2: #{tpu_custom_call.1} parent=1 // pred_check
      _
    $region3: #{tpu_custom_call.1} parent=1 // pred_check_branch
      %16 = sbr.rel (0) target = $region5
    $region4: #{tpu_custom_call.1} parent=1 // pred_region
      _
    $region5: #{tpu_custom_call.1} parent=1 // pred_fallthru
      _
    // Predicated region
    $region6: #{tpu_custom_call.1} parent=1 // pred_check
      _
    $region7: #{tpu_custom_call.1} parent=1 // pred_check_branch
      %18 = sbr.rel (0) target = $region9
    $region8: #{tpu_custom_call.1} parent=1 // pred_region
      _
    $region9: #{tpu_custom_call.1} parent=1 // pred_fallthru
      _
    // Predicated region
    $region10: #{tpu_custom_call.1} parent=1 // pred_check
      _
    $region11: #{tpu_custom_call.1} parent=1 // pred_check_branch
      %20 = sbr.rel (0) target = $region13
    $region12: #{tpu_custom_call.1} parent=1 // pred_region
      _
    $region13: #{tpu_custom_call.1} parent=1 // pred_fallthru
      _
    // Predicated region
    $region14: #{tpu_custom_call.1} parent=1 // pred_check
      _
    $region15: #{tpu_custom_call.1} parent=1 // pred_check_branch
      %22 = sbr.rel (0) target = $region17
    $region16: #{tpu_custom_call.1} parent=1 // pred_region
      _
    $region17: #{tpu_custom_call.1} parent=1 // pred_fallthru
      _
    // Predicated region
    $region18: #{tpu_custom_call.1} parent=1 // pred_check
      _
    $region19: #{tpu_custom_call.1} parent=1 // pred_check_branch
      %24 = sbr.rel (0) target = $region21
    $region20: #{tpu_custom_call.1} parent=1 // pred_region
      _
    $region21: #{tpu_custom_call.1} parent=1 // pred_fallthru
      _
    // Predicated region
    $region22: #{tpu_custom_call.1} parent=1 // pred_check
      _
    $region23: #{tpu_custom_call.1} parent=1 // pred_check_branch
      %26 = sbr.rel (0) target = $region25
    $region24: #{tpu_custom_call.1} parent=1 // pred_region
      _
    $region25: #{tpu_custom_call.1} parent=1 // pred_fallthru
      _
    // Predicated region
    $region26: #{tpu_custom_call.1} parent=1 // pred_check
      _
    $region27: #{tpu_custom_call.1} parent=1 // pred_check_branch
      %28 = sbr.rel (0) target = $region29
    $region28: #{tpu_custom_call.1} parent=1 // pred_region
      _
    $region29: #{tpu_custom_call.1} parent=1 // pred_fallthru
      _
    // Predicated region
    $region30: #{tpu_custom_call.1} parent=1 // pred_check
      _
    $region31: #{tpu_custom_call.1} parent=1 // pred_check_branch
      %30 = sbr.rel (0) target = $region33
    $region32: #{tpu_custom_call.1} parent=1 // pred_region
      _
    $region33: #{tpu_custom_call.1} parent=1 // pred_fallthru
      _
    // Predicated region
    $region34: #{tpu_custom_call.1} parent=1 // pred_check
      _
    $region35: #{tpu_custom_call.1} parent=1 // pred_check_branch
      %32 = sbr.rel (0) target = $region37
    $region36: #{tpu_custom_call.1} parent=1 // pred_region
      _
    $region37: #{tpu_custom_call.1} parent=1 // pred_fallthru
      _
    %v34 = vld [vmem:[%s0] sm:$0xff]
    %v35 = vld [vmem:[%s1] sm:$0x1]
    %37 = vset.pattern.permute.xlu0 0
    %38 = vperm.xlu0 %37, %v34
    %v39 = vpop.permute.xlu0 %38
    %v41 = vperm.slane %v35, 0
    %v42 = vmul.f32 %v39, %v41
    %v43 = vld [vmem:[%s1 + $0x1] sm:$0x1]
    %44 = vset.pattern.permute.xlu0 1
    %45 = vperm.xlu0 %44, %v34
    %v46 = vpop.permute.xlu0 %45
    %v48 = vperm.slane %v43, 0
    %v49 = vmul.f32 %v46, %v48
    %v50 = vadd.f32 %v42, %v49
    %v51 = vld [vmem:[%s2] sm:$0x1]
    %v53 = vperm.slane %v51, 0
    %v55 = vadd.f32 %v50, %v53
    %v56 = vand.u32 2147483647, %v55
    %vm57 = vcmp.le.f32.partialorder %v56, 0.7853982
    %vm58 = vcmp.lt.s32.totalorder %v55, 0
    %v59 = vand.u32 %v55, 2139095040
    %v60 = vshrl.u32 %v59, 23
    %v61 = vsub.s32 %v60, 127
    %v62 = vand.u32 2147483647, %v55
    %v63 = vand.u32 %v62, 8388607
    %v64 = vor.u32 %v63, 8388608
    %v65 = vsub.s32 0, %v64
    %v66 = vadd.s32 %v61, 1
    %vm67 = vcmp.gt.s32.totalorder %v66, 0
    %v68 = vsel %vm67, %v66, 0
    %v69 = vshrl.u32 %v68, 5
    %v70 = vand.u32 %v68, 31
    %v71 = vsub.s32 32, %v70
    %v72 = vshrl.u32 683565275, %v71
    %v73 = vshll.u32 683565275, %v70
    %v74 = vshrl.u32 2475754826, %v71
    %v75 = vor.u32 %v73, %v74
    %v76 = vshll.u32 2475754826, %v70
    %v77 = vshrl.u32 2131351028, %v71
    %v78 = vor.u32 %v76, %v77
    %v79 = vshll.u32 2131351028, %v70
    %v80 = vshrl.u32 2102212464, %v71
    %v81 = vor.u32 %v79, %v80
    %v82 = vshll.u32 2102212464, %v70
    %v83 = vshrl.u32 920167782, %v71
    %v84 = vor.u32 %v82, %v83
    %v85 = vshll.u32 920167782, %v70
    %v86 = vshrl.u32 1326507024, %v71
    %v87 = vor.u32 %v85, %v86
    %vm88 = vcmp.lt.s32.totalorder %v69, 1
    %vm89 = vcmp.lt.s32.totalorder %v69, 2
    %vm90 = vcmp.lt.s32.totalorder %v69, 3
    %vm91 = vcmp.lt.s32.totalorder %v69, 4
    %v92 = vsel %vm88, %v72, %v75
    %v93 = vsel %vm91, %v81, 2102212464
    %v94 = vsel %vm90, %v78, %v93
    %v95 = vsel %vm89, %v92, %v94
    %v96 = vsel %vm88, %v75, %v78
    %v97 = vsel %vm91, %v84, 920167782
    %v98 = vsel %vm90, %v81, %v97
    %v99 = vsel %vm89, %v96, %v98
    %v100 = vsel %vm88, %v78, %v81
    %v101 = vsel %vm91, %v87, 1326507024
    %v102 = vsel %vm90, %v84, %v101
    %v103 = vsel %vm89, %v100, %v102
    %v104 = vshll.u32 %v64, 8
    %v105 = vand.u32 %v104, 65535
    %v106 = vshrl.u32 %v104, 16
    %v107 = vand.u32 %v103, 65535
    %v108 = vshrl.u32 %v103, 16
    %v109 = vmul.u32 %v105, %v107
    %v110 = vmul.u32 %v105, %v108
    %v111 = vmul.u32 %v106, %v107
    %v112 = vmul.u32 %v106, %v108
    %v113 = vshll.u32 %v110, 16
    %v114 = vshrl.u32 %v110, 16
    %v115 = vshll.u32 %v111, 16
    %v116 = vshrl.u32 %v111, 16
    %vm117 = vc.u32 %v109, %v113
    %v118 = vsel %vm117, 1, 0
    %v119 = vadd.s32 %v109, %v113
    %v120 = vadd.s32 %v112, %v118
    %vm121 = vc.u32 %v119, %v115
    %v122 = vsel %vm121, 1, 0
    %v123 = vadd.s32 %v119, %v115
    %v124 = vadd.s32 %v120, %v122
    %v125 = vadd.s32 %v124, %v114
    %v126 = vadd.s32 %v125, %v116
    %v127 = vand.u32 %v104, 65535
    %v128 = vshrl.u32 %v104, 16
    %v129 = vand.u32 %v99, 65535
    %v130 = vshrl.u32 %v99, 16
    %v131 = vmul.u32 %v127, %v129
    %v132 = vmul.u32 %v127, %v130
    %v133 = vmul.u32 %v128, %v129
    %v134 = vmul.u32 %v128, %v130
    %v135 = vshll.u32 %v132, 16
    %v136 = vshrl.u32 %v132, 16
    %v137 = vshll.u32 %v133, 16
    %v138 = vshrl.u32 %v133, 16
    %vm139 = vc.u32 %v131, %v135
    %v140 = vsel %vm139, 1, 0
    %v141 = vadd.s32 %v131, %v135
    %v142 = vadd.s32 %v134, %v140
    %vm143 = vc.u32 %v141, %v137
    %v144 = vsel %vm143, 1, 0
    %v145 = vadd.s32 %v141, %v137
    %v146 = vadd.s32 %v142, %v144
    %v147 = vadd.s32 %v146, %v136
    %v148 = vadd.s32 %v147, %v138
    %v149 = vmul.u32 %v104, %v95
    %v150 = vadd.s32 %v126, %v145
    %vm151 = vc.u32 %v126, %v145
    %v152 = vadd.s32 %v148, 1
    %v153 = vsel %vm151, %v152, %v148
    %v154 = vadd.s32 %v149, %v153
    %v155 = vadd.s32 %v154, 536870912
    %v156 = vshrl.u32 %v155, 30
    %v157 = vshll.u32 %v156, 30
    %v158 = vsub.s32 %v154, %v157
    %vm159 = vcmp.lt.s32.totalorder %v158, 0
    %v160 = vsub.s32 0, %v158
    %v161 = vsel %vm159, %v160, %v158
    %v162 = vclz %v161
    %v163 = vsub.s32 %v162, 2
    %vm164 = vcmp.gt.s32.totalorder 0, %v163
    %v165 = vsel %vm164, 0, %v163
    %v166 = vsub.s32 32, %v165
    %v167 = vshll.u32 %v158, %v165
    %v168 = vshrl.u32 %v150, %v166
    %v169 = vor.u32 %v167, %v168
    %v170 = vsub.s32 4294967266, %v165
    %v171 = vadd.s32 %v170, 127
    %v172 = vshll.u32 %v171, 23
    %v173 = vor.u32 4788187, %v172
    %v174 = vand.u32 2147483647, %v173
    %v176 = vcvt.s32.f32 %v169
    %v177 = vmul.f32 %v176, %v174
    %v178 = vxor.u32 %v177, 2147483648
    %v179 = vsel %vm58, %v178, %v177
    %v180 = vsub.s32 4, %v156
    %v181 = vsel %vm58, %v180, %v156
    %v182 = vsel %vm57, %v55, %v179
    %v183 = vsel %vm57, 0, %v181
    %v184 = vmul.f32 %v182, %v182
    %v185 = vmul.f32 %v184, -0.001358992
    %v186 = vadd.f32 %v185, 0.041655596
    %v187 = vmul.f32 %v184, %v186
    %v188 = vadd.f32 %v187, -0.4999988
    %v189 = vmul.f32 %v184, %v188
    %v190 = vadd.f32 1.0, %v189
    %v191 = vmul.f32 %v182, %v182
    %v192 = vmul.f32 %v191, -0.00019511016
    %v193 = vadd.f32 %v192, 0.008332121
    %v194 = vmul.f32 %v191, %v193
    %v195 = vadd.f32 %v194, -0.16666654
    %v196 = vmul.f32 %v191, %v195
    %v197 = vadd.f32 %v196, 1.0
    %v198 = vmul.f32 %v197, %v182
    %vm199 = vweird.f32 %v55
    %v200 = vadd.s32 %v183, 3
    %v201 = vand.u32 %v200, 3
    %vm202 = vcmp.lt.s32.totalorder %v201, 2
    %vm203 = vcmp.eq.s32.totalorder %v201, 0
    %v204 = vxor.u32 %v198, 2147483648
    %v205 = vsel %vm203, %v190, %v204
    %vm206 = vcmp.eq.s32.totalorder %v201, 2
    %v207 = vxor.u32 %v190, 2147483648
    %v208 = vsel %vm206, %v207, %v198
    %v209 = vsel %vm202, %v205, %v208
    %v210 = vsel %vm199, nan, %v209
    %v211 = vpack.c.bf16 %v210, %v210
    %v212 = vld [vmem:[%s3] sm:$0xf]
    %v213 = vld [vmem:[%s3 + $0x4] sm:$0xf]
    %v214 = vld [vmem:[%s3 + $0x8] sm:$0xf]
    %v215 = vld [vmem:[%s3 + $0xc] sm:$0xf]
    %v216 = vld [vmem:[%s3 + $0x10] sm:$0xf]
    %v217 = vld [vmem:[%s3 + $0x14] sm:$0xf]
    %v218 = vld [vmem:[%s3 + $0x18] sm:$0xf]
    %v219 = vld [vmem:[%s3 + $0x1c] sm:$0xf]
    %v220 = vld [vmem:[%s4] sm:$0x1]
    %v222 = vperm.slane %v220, 0
    %v232 = vunpack.c.l.b16 %v212
    %v233 = vunpack.c.l.b16 %v213
    %v234 = vunpack.c.l.b16 %v214
    %v235 = vunpack.c.l.b16 %v215
    %v236 = vunpack.c.l.b16 %v216
    %v237 = vunpack.c.l.b16 %v217
    %v238 = vunpack.c.l.b16 %v218
    %v239 = vunpack.c.l.b16 %v219
    %v240 = vpack.c.b16 %v233, %v232
    %v241 = vpack.c.b16 %v235, %v234
    %v242 = vpack.c.b16 %v237, %v236
    %v243 = vpack.c.b16 %v239, %v238
    %vm248 = vcmask 523264
    %v250 = vsel %vm248, %v211, 0
    %252 = vmatpush.bf16.msra.mxu0 0
    %253 = vmatpush.bf16.msra.mxu0 0
    %254 = vmatpush.bf16.msra.mxu0 0
    %255 = vmatpush.bf16.msra.mxu0 0
    %256 = vmatpush.bf16.msra.mxu0 %v243
    %257 = vmatpush.bf16.msra.mxu0 %v242
    %258 = vmatpush.bf16.msra.mxu0 %v241
    %259 = vmatpush.bf16.msra.mxu0 %v240
    %260 = vmatmul.bf16.gmra.mxu0 %v250
    %v261 = vpop.f32.mrf.mxu0
    %v262 = vadd.f32 %v222, %v261
    %v263 = vpop.f32.mrf.mxu0
    %264 = vdwg.mxu0
    %v265 = vmax.f32 %v262, 0.0
    %v266 = vpack.c.bf16 %v265, %v265
    %v267 = vld [vmem:[%s5] sm:$0xf]
    %v268 = vld [vmem:[%s5 + $0x4] sm:$0xf]
    %v269 = vld [vmem:[%s5 + $0x8] sm:$0xf]
    %v270 = vld [vmem:[%s5 + $0xc] sm:$0xf]
    %v271 = vld [vmem:[%s5 + $0x10] sm:$0xf]
    %v272 = vld [vmem:[%s5 + $0x14] sm:$0xf]
    %v273 = vld [vmem:[%s5 + $0x18] sm:$0xf]
    %v274 = vld [vmem:[%s5 + $0x1c] sm:$0xf]
    %v275 = vld [vmem:[%s5 + $0x20] sm:$0xf]
    %v276 = vld [vmem:[%s5 + $0x24] sm:$0xf]
    %v277 = vld [vmem:[%s5 + $0x28] sm:$0xf]
    %v278 = vld [vmem:[%s5 + $0x2c] sm:$0xf]
    %v279 = vld [vmem:[%s5 + $0x30] sm:$0xf]
    %v280 = vld [vmem:[%s5 + $0x34] sm:$0xf]
    %v281 = vld [vmem:[%s5 + $0x38] sm:$0xf]
    %v282 = vld [vmem:[%s5 + $0x3c] sm:$0xf]
    %v283 = vld [vmem:[%s6] sm:$0x1]
    %v285 = vperm.slane %v283, 0
    %v303 = vunpack.c.l.b16 %v267
    %v304 = vunpack.c.l.b16 %v268
    %v305 = vunpack.c.l.b16 %v269
    %v306 = vunpack.c.l.b16 %v270
    %v307 = vunpack.c.l.b16 %v271
    %v308 = vunpack.c.l.b16 %v272
    %v309 = vunpack.c.l.b16 %v273
    %v310 = vunpack.c.l.b16 %v274
    %v311 = vunpack.c.l.b16 %v275
    %v312 = vunpack.c.l.b16 %v276
    %v313 = vunpack.c.l.b16 %v277
    %v314 = vunpack.c.l.b16 %v278
    %v315 = vunpack.c.l.b16 %v279
    %v316 = vunpack.c.l.b16 %v280
    %v317 = vunpack.c.l.b16 %v281
    %v318 = vunpack.c.l.b16 %v282
    %v319 = vpack.c.b16 %v304, %v303
    %v320 = vpack.c.b16 %v306, %v305
    %v321 = vpack.c.b16 %v308, %v307
    %v322 = vpack.c.b16 %v310, %v309
    %v323 = vpack.c.b16 %v312, %v311
    %v324 = vpack.c.b16 %v314, %v313
    %v325 = vpack.c.b16 %v316, %v315
    %v326 = vpack.c.b16 %v318, %v317
    %335 = vmatpush.bf16.msra.mxu0 %v326
    %336 = vmatpush.bf16.msra.mxu0 %v325
    %337 = vmatpush.bf16.msra.mxu0 %v324
    %338 = vmatpush.bf16.msra.mxu0 %v323
    %339 = vmatpush.bf16.msra.mxu0 %v322
    %340 = vmatpush.bf16.msra.mxu0 %v321
    %341 = vmatpush.bf16.msra.mxu0 %v320
    %342 = vmatpush.bf16.msra.mxu0 %v319
    %343 = vmatmul.bf16.gmra.mxu0 %v266
    %v344 = vpop.f32.mrf.mxu0
    %v345 = vadd.f32 %v285, %v344
    %v346 = vpop.f32.mrf.mxu0
    %347 = vdwg.mxu0
    %v348 = vmax.f32 %v345, 0.0
    %v349 = vpack.c.bf16 %v348, %v348
    %v350 = vld [vmem:[%s7] sm:$0xf]
    %v351 = vld [vmem:[%s7 + $0x4] sm:$0xf]
    %v352 = vld [vmem:[%s7 + $0x8] sm:$0xf]
    %v353 = vld [vmem:[%s7 + $0xc] sm:$0xf]
    %v354 = vld [vmem:[%s7 + $0x10] sm:$0xf]
    %v355 = vld [vmem:[%s7 + $0x14] sm:$0xf]
    %v356 = vld [vmem:[%s7 + $0x18] sm:$0xf]
    %v357 = vld [vmem:[%s7 + $0x1c] sm:$0xf]
    %v358 = vld [vmem:[%s8] sm:$0x1]
    %v360 = vperm.slane %v358, 0
    %v370 = vunpack.c.l.b16 %v350
    %v371 = vunpack.c.l.b16 %v351
    %v372 = vunpack.c.l.b16 %v352
    %v373 = vunpack.c.l.b16 %v353
    %v374 = vunpack.c.l.b16 %v354
    %v375 = vunpack.c.l.b16 %v355
    %v376 = vunpack.c.l.b16 %v356
    %v377 = vunpack.c.l.b16 %v357
    %v378 = vpack.c.b16 %v371, %v370
    %v379 = vpack.c.b16 %v373, %v372
    %v380 = vpack.c.b16 %v375, %v374
    %v381 = vpack.c.b16 %v377, %v376
    %v387 = vsel %vm248, %v349, 0
    %389 = vmatpush.bf16.msra.mxu0 0
    %390 = vmatpush.bf16.msra.mxu0 0
    %391 = vmatpush.bf16.msra.mxu0 0
    %392 = vmatpush.bf16.msra.mxu0 0
    %393 = vmatpush.bf16.msra.mxu0 %v381
    %394 = vmatpush.bf16.msra.mxu0 %v380
    %395 = vmatpush.bf16.msra.mxu0 %v379
    %396 = vmatpush.bf16.msra.mxu0 %v378
    %397 = vmatmul.bf16.gmra.mxu0 %v387
    %v398 = vpop.f32.mrf.mxu0
    %v399 = vadd.f32 %v360, %v398
    %v400 = vpop.f32.mrf.mxu0
    %401 = vdwg.mxu0
    %402 = vst [vmem:[#allocation2] sm:$0xff] %v399
    // Predicated region
    $region38: #{tpu_custom_call.1} parent=1 // pred_check
      _
    $region39: #{tpu_custom_call.1} parent=1 // pred_check_branch
      %404 = sbr.rel (0) target = $region41
    $region40: #{tpu_custom_call.1} parent=1 // pred_region
      %406 = vsyncadd [#allocation3], 0
      %s408 = sshll.u32 [#allocation2], 4
      %s409 = int_to_ptr.vmem [resolvable:$true] %s408
      %s410 = sshll.u32 %s9, 4
      %s411 = int_to_ptr.hbm [resolvable:$true] %s410
      %413 = dma.vmem_to_hbm [thread:$0]  %s409, 128, %s411, [#allocation3]
    $region41: #{tpu_custom_call.1} parent=1 // pred_fallthru
      _
    // Predicated region
    $region42: #{tpu_custom_call.1} parent=1 // pred_check
      _
    $region43: #{tpu_custom_call.1} parent=1 // pred_check_branch
      %415 = sbr.rel (0) target = $region45
    $region44: #{tpu_custom_call.1} parent=1 // pred_region
      %417 = dma.done [#allocation3], 128
    $region45: #{tpu_custom_call.1} parent=1 // pred_fallthru
      _
    %418 = vsyncpa [#allocation3], 1

</llo_original>
